<compile_context>
chip_gen: v7x
topology: tpu7x:2x2x1
jax: 0.10.0
libtpu: 0.0.40
codegen_flags: <defaults>
</compile_context>

<pallas_src>
import functools

import jax
import jax.numpy as jnp
from jax.experimental import pallas as pl
from jax.experimental.pallas import tpu as pltpu


def _adapter_kernel(x_ref, wd_ref, bd_ref, wu_ref, bu_ref, o_ref):
    """Fused adapter forward for one tile of rows.

    x_ref  : (TM, D)  input tokens, compute dtype (bf16 preferred)
    wd_ref : (D,  H)  down-sampler weight, compute dtype
    bd_ref : (1,  H)  down-sampler bias, f32
    wu_ref : (H,  D)  up-sampler weight, compute dtype
    bu_ref : (1,  D)  up-sampler bias, f32
    o_ref  : (TM, D)  output, original dtype
    """
    # Down projection: native-dtype operands on the MXU, f32 accumulation.
    z = jnp.dot(x_ref[...], wd_ref[...], preferred_element_type=jnp.float32)
    # Bias + ReLU in f32 on the VPU (keeps v5e happy: no bf16 VALU there).
    z = jnp.maximum(z + bd_ref[...], 0.0)
    # TODO(synk): track_z (stashing the intermediate activation on the module)
    # has no in-kernel equivalent; expose z as a second output if needed.

    # Up projection: cast the activation back to the MXU-native dtype.
    out = jnp.dot(z.astype(wu_ref.dtype), wu_ref[...],
                  preferred_element_type=jnp.float32)
    out = out + bu_ref[...]
    o_ref[...] = out.astype(o_ref.dtype)


def _round_up(x, m):
    return (x + m - 1) // m * m


def _choose_row_tile(M, block_m):
    """Pick a row tile: multiple of 8, >= 2 grid steps when rows allow (v7x)."""
    block_m = max(8, _round_up(block_m, 8))
    if M > block_m:
        return block_m
    # Split a single-tile problem into >= 2 tiles so the "parallel" grid axis
    # can shard across both TensorCores on v7x.
    if M >= 16 and M % 8 == 0:
        return _round_up(pl.cdiv(M, 2), 8)
    return M


@functools.partial(jax.jit, static_argnames=("block_m", "compute_dtype"))
def adapter_forward(x, w_down, b_down, w_up, b_up, *,
                    block_m=512, compute_dtype=jnp.bfloat16):
    """x: [B, S, D] -> [B, S, D].  Fused down-proj -> ReLU -> up-proj."""
    B, S, D = x.shape
    H = w_down.shape[1]
    M = B * S
    out_dtype = x.dtype
    cdt = jnp.dtype(compute_dtype)

    # bf16 (by default) I/O for the big operands halves HBM traffic; biases
    # stay f32 so the bias-add / ReLU math runs in f32.
    x2d = x.reshape(M, D).astype(cdt)
    wd = w_down.astype(cdt)
    wu = w_up.astype(cdt)
    bd2 = b_down.reshape(1, H).astype(jnp.float32)
    bu2 = b_up.reshape(1, D).astype(jnp.float32)

    tm = _choose_row_tile(M, block_m)
    grid = (pl.cdiv(M, tm),)   # partial last block is masked by Pallas

    # VMEM budget: double-buffered x/out tiles + (double-buffered) resident
    # weights/biases, with 2x headroom.  Floor at the 32 MiB scoped default,
    # cap below physical VMEM (on v7x keep block_m such that the estimate
    # stays under ~48 MiB).
    in_bytes = cdt.itemsize
    out_bytes = jnp.dtype(out_dtype).itemsize
    vmem_need = (2 * tm * D * in_bytes
                 + 2 * tm * D * out_bytes
                 + 2 * (D * H + H * D) * in_bytes
                 + 2 * (H + D) * 4)
    vmem_limit = int(min(max(2 * vmem_need, 32 * 1024 * 1024),
                         100 * 1024 * 1024))

    out2d = pl.pallas_call(
        _adapter_kernel,
        out_shape=jax.ShapeDtypeStruct((M, D), out_dtype),
        grid_spec=pltpu.PrefetchScalarGridSpec(
            num_scalar_prefetch=0,
            grid=grid,
            in_specs=[
                pl.BlockSpec((tm, D), lambda i: (i, 0)),   # x tile
                pl.BlockSpec((D, H), lambda i: (0, 0)),    # W_down (resident)
                pl.BlockSpec((1, H), lambda i: (0, 0)),    # b_down (f32)
                pl.BlockSpec((H, D), lambda i: (0, 0)),    # W_up   (resident)
                pl.BlockSpec((1, D), lambda i: (0, 0)),    # b_up   (f32)
            ],
            out_specs=pl.BlockSpec((tm, D), lambda i: (i, 0)),
        ),
        compiler_params=pltpu.CompilerParams(
            dimension_semantics=("parallel",),
            vmem_limit_bytes=vmem_limit),
    )(x2d, wd, bd2, wu, bu2)

    return out2d.reshape(B, S, D)


def reference_forward(x, w_down, b_down, w_up, b_up):
    z = jnp.einsum("bsd,dh->bsh", x.astype(jnp.float32),
                   w_down.astype(jnp.float32)) + b_down.astype(jnp.float32)
    z = jnp.maximum(z, 0.0)
    out = (jnp.einsum("bsh,hd->bsd", z, w_up.astype(jnp.float32))
           + b_up.astype(jnp.float32))
    return out.astype(x.dtype)


if __name__ == "__main__":
    # Config: d_model=32, reduction_factor=2 -> down_sample_size=16 -> hidden=8
    # (Demo-scale shapes; production d_model / H should be multiples of 128 for
    # lane-dense stores and MXU utilization.)
    B, S, D = 2, 8, 32
    reduction_factor = 2
    H = (D // reduction_factor) // 2  # down_sampler1 output dim

    key = jax.random.PRNGKey(0)
    kx, kwd, kbd, kwu, kbu = jax.random.split(key, 5)

    x = jax.random.normal(kx, (B, S, D), dtype=jnp.float32)
    # deterministic "init" of the adapter parameters
    w_down = jax.random.normal(kwd, (D, H), dtype=jnp.float32) * 0.05
    b_down = jax.random.normal(kbd, (H,), dtype=jnp.float32) * 0.01
    w_up = jax.random.normal(kwu, (H, D), dtype=jnp.float32) * 0.05
    b_up = jax.random.normal(kbu, (D,), dtype=jnp.float32) * 0.01

    ref = reference_forward(x, w_down, b_down, w_up, b_up)

    # f32 compute path: tight check against the f32 reference.
    out_f32 = adapter_forward(x, w_down, b_down, w_up, b_up,
                              compute_dtype=jnp.float32)
    out_f32 = jax.block_until_ready(out_f32)
    assert out_f32.shape == (B, S, D)
    assert jnp.allclose(out_f32, ref, atol=1e-4, rtol=1e-4), "f32 path mismatch"

    # Default bf16-fed-MXU path (production): looser tolerance because of
    # expected bf16 quantization of x / weights / intermediate z (not a bug).
    out_bf16 = adapter_forward(x, w_down, b_down, w_up, b_up)
    out_bf16 = jax.block_until_ready(out_bf16)
    assert out_bf16.shape == (B, S, D)
    assert jnp.allclose(out_bf16, ref, atol=3e-2, rtol=3e-2), "bf16 path mismatch"

    print("KERNEL_OK")
</pallas_src>

<mosaic_0001>
module attributes {stable_mosaic.version = 11 : i64} {
  func.func @_adapter_kernel(%arg0: i32, %arg1: memref<8x32xf32, #tpu.memory_space<vmem>>, %arg2: memref<32x8xf32, #tpu.memory_space<vmem>>, %arg3: memref<1x8xf32, #tpu.memory_space<vmem>>, %arg4: memref<8x32xf32, #tpu.memory_space<vmem>>, %arg5: memref<1x32xf32, #tpu.memory_space<vmem>>, %arg6: memref<8x32xf32, #tpu.memory_space<vmem>>) attributes {dimension_semantics = [#tpu.dimension_semantics<parallel>], iteration_bounds = array<i64: 2>, scalar_prefetch = 0 : i64, scratch_operands = 0 : i64, tpu.core_type = #tpu.core_type<tc>, window_params = [{transform_indices = @transform_0, window_bounds = array<i64: 8, 32>}, {pipeline_mode = #tpu.pipeline_mode<synchronous>, transform_indices = @transform_1, window_bounds = array<i64: 32, 8>}, {pipeline_mode = #tpu.pipeline_mode<synchronous>, transform_indices = @transform_2, window_bounds = array<i64: 1, 8>}, {pipeline_mode = #tpu.pipeline_mode<synchronous>, transform_indices = @transform_3, window_bounds = array<i64: 8, 32>}, {pipeline_mode = #tpu.pipeline_mode<synchronous>, transform_indices = @transform_4, window_bounds = array<i64: 1, 32>}, {transform_indices = @transform_5, window_bounds = array<i64: 8, 32>}]} {
    %c0 = arith.constant 0 : index
    %c0_0 = arith.constant 0 : index
    %0 = vector.load %arg1[%c0, %c0_0] : memref<8x32xf32, #tpu.memory_space<vmem>>, vector<8x32xf32>
    %c0_1 = arith.constant 0 : index
    %c0_2 = arith.constant 0 : index
    %1 = vector.load %arg2[%c0_1, %c0_2] : memref<32x8xf32, #tpu.memory_space<vmem>>, vector<32x8xf32>
    %cst = arith.constant dense<0.000000e+00> : vector<8x8xf32>
    %2 = tpu.matmul %0, %1, %cst {dimension_numbers = #tpu.dot_dimension_numbers<[1], [0], [0], [1], [0, 0, 1, 1], [], []>} : vector<8x32xf32>, vector<32x8xf32>, vector<8x8xf32> -> vector<8x8xf32>
    %c0_3 = arith.constant 0 : index
    %c0_4 = arith.constant 0 : index
    %3 = vector.load %arg3[%c0_3, %c0_4] : memref<1x8xf32, #tpu.memory_space<vmem>>, vector<1x8xf32>
    %4 = vector.broadcast %3 : vector<1x8xf32> to vector<8x8xf32>
    %5 = arith.addf %2, %4 : vector<8x8xf32>
    %cst_5 = arith.constant 0.000000e+00 : f32
    %6 = vector.broadcast %cst_5 : f32 to vector<8x8xf32>
    %7 = arith.maximumf %5, %6 : vector<8x8xf32>
    %c0_6 = arith.constant 0 : index
    %c0_7 = arith.constant 0 : index
    %8 = vector.load %arg4[%c0_6, %c0_7] : memref<8x32xf32, #tpu.memory_space<vmem>>, vector<8x32xf32>
    %cst_8 = arith.constant dense<0.000000e+00> : vector<8x32xf32>
    %9 = tpu.matmul %7, %8, %cst_8 {dimension_numbers = #tpu.dot_dimension_numbers<[1], [0], [0], [1], [0, 0, 1, 1], [], []>} : vector<8x8xf32>, vector<8x32xf32>, vector<8x32xf32> -> vector<8x32xf32>
    %c0_9 = arith.constant 0 : index
    %c0_10 = arith.constant 0 : index
    %10 = vector.load %arg5[%c0_9, %c0_10] : memref<1x32xf32, #tpu.memory_space<vmem>>, vector<1x32xf32>
    %11 = vector.broadcast %10 : vector<1x32xf32> to vector<8x32xf32>
    %12 = arith.addf %9, %11 : vector<8x32xf32>
    %c0_11 = arith.constant 0 : index
    %c0_12 = arith.constant 0 : index
    %13 = vector.load %arg6[%c0_11, %c0_12] : memref<8x32xf32, #tpu.memory_space<vmem>>, vector<8x32xf32>
    tpu.vector_store %arg6[%c0_11, %c0_12], %12 {strides = array<i32>} : memref<8x32xf32, #tpu.memory_space<vmem>>, vector<8x32xf32>,
    return
  }
  func.func @transform_0(%arg0: i32) -> (i32, i32) {
    %c0_i32 = arith.constant 0 : i32
    %c0_i32_0 = arith.constant 0 : i32
    return %arg0, %c0_i32 : i32, i32
  }
  func.func @transform_1(%arg0: i32) -> (i32, i32) {
    %c0_i32 = arith.constant 0 : i32
    %c0_i32_0 = arith.constant 0 : i32
    %c0_i32_1 = arith.constant 0 : i32
    return %c0_i32, %c0_i32_0 : i32, i32
  }
  func.func @transform_2(%arg0: i32) -> (i32, i32) {
    %c0_i32 = arith.constant 0 : i32
    %c0_i32_0 = arith.constant 0 : i32
    %c0_i32_1 = arith.constant 0 : i32
    return %c0_i32, %c0_i32_0 : i32, i32
  }
  func.func @transform_3(%arg0: i32) -> (i32, i32) {
    %c0_i32 = arith.constant 0 : i32
    %c0_i32_0 = arith.constant 0 : i32
    %c0_i32_1 = arith.constant 0 : i32
    return %c0_i32, %c0_i32_0 : i32, i32
  }
  func.func @transform_4(%arg0: i32) -> (i32, i32) {
    %c0_i32 = arith.constant 0 : i32
    %c0_i32_0 = arith.constant 0 : i32
    %c0_i32_1 = arith.constant 0 : i32
    return %c0_i32, %c0_i32_0 : i32, i32
  }
  func.func @transform_5(%arg0: i32) -> (i32, i32) {
    %c0_i32 = arith.constant 0 : i32
    %c0_i32_0 = arith.constant 0 : i32
    return %arg0, %c0_i32 : i32, i32
  }
}

</mosaic_0001>

<llo_original>
// kernel: adapter_forward.1
$region0: #{adapter_forward.1}
  #allocation0 [shape = 'u32[]', space=smem, size = 0x4, offset = 0x4, fixed_abs, tag = 'smem constant byte address 0x4 - core index']
  #allocation1 [shape = 'u32[144,128]{1,0:T(1,128)}', space=vmem, size = 0x12000, scoped, tag = 'internal scratch']
  %s0 = inlined_call_operand.vmem [shape: f32[16,32], index: 0, kind: input, shape index: {}]
  %s1 = inlined_call_operand.vmem [shape: f32[32,8], index: 1, kind: input, shape index: {}]
  %s2 = inlined_call_operand.vmem [shape: f32[1,8], index: 2, kind: input, shape index: {}]
  %s3 = inlined_call_operand.vmem [shape: f32[8,32], index: 3, kind: input, shape index: {}]
  %s4 = inlined_call_operand.vmem [shape: f32[1,32], index: 4, kind: input, shape index: {}]
  %s5 = inlined_call_operand.hbm [shape: f32[16,32], index: 5, kind: output, shape index: {}]
  %s6 = sld [smem:[#allocation0]]
  $region53: #{adapter_forward.1} parent=0
    _
  %s8 = ssub.s32 1, %s6
  %s9 = scalar_select 0, %s8, %s6
  $region1: #{adapter_forward.1} parent=0
    #allocation2 [shape = 'u8[8192]{0}', space=vmem, size = 0x2000, scoped, tag = 'output window, operand 0']
    #allocation3 [shape = 's32[2]{0}', space=sflag, size = 0x8, scoped, tag = 'scoped memory for adapter_forward.1']
    %10 = vsyncpa [#allocation3], 0
    %s11 = scalar_lea.sflag [#allocation3], 1
    %12 = vsyncpa %s11, 0
    loop: start=0, step=1, limit=4
    $region2: #{adapter_forward.1} parent=1 // loop_pre_header
      _
    $region3: #{adapter_forward.1} parent=1 // loop_header
      %s14 = sphi 0, %s18
      %p15 = scmp.ge.s32.totalorder %s14, 4
      %s24 = sphi 0, %s26
      %s27 = sphi 0, %s24
      %s28 = sphi 0, %s27
      %s44 = sphi 0, %s28
      %s48 = sphi 0, %s48
      %s50 = sphi 0, %s48
      %s51 = sphi 0, %s50
      %s65 = sphi 0, %s51
      %s69 = sphi 0, %s69
      %s71 = sphi 0, %s69
      %s72 = sphi 0, %s71
      %s86 = sphi 0, %s72
      %s90 = sphi 0, %s90
      %s92 = sphi 0, %s90
      %s93 = sphi 0, %s92
      %s107 = sphi 0, %s93
      %s111 = sphi 0, %s111
      %s113 = sphi 0, %s111
      %s114 = sphi 0, %s113
      %s128 = sphi 0, %s114
      %s134 = sphi 0, %s136
      %s137 = sphi 0, %s134
      %s138 = sphi 0, %s137
      %s154 = sphi 0, %s138
    $region4: #{adapter_forward.1} parent=1 // loop_header_branch
      %17 = sbr.rel (%p15) target = $region8
    $region5: #{adapter_forward.1} parent=1 // loop_body
      %s19 = ssub.s32 %s14, 1
      %s20 = ssub.s32 %s14, 2
      %s21 = sadd.s32 %s14, 1
      %s22 = ssub.s32 %s14, %s21
      %p23 = scmp.eq.s32.totalorder %s22, 0
      %s25 = sadd.s32 %s24, 1
      %s26 = scalar_select %p23, %s24, %s25
      %p29 = pneg %p23
      %p30 = scmp.eq.s32.totalorder %s14, 1
      %p31 = por %p29, %p30
      %p32 = scmp.ne.s32.totalorder %s24, %s27
      %p33 = scmp.eq.s32.totalorder %s14, 0
      %p34 = por %p32, %p33
      %p35 = scmp.ne.s32.totalorder %s24, %s27
      %p36 = scmp.eq.s32.totalorder %s19, 1
      %p37 = por %p35, %p36
      %p38 = scmp.ne.s32.totalorder %s27, %s28
      %p39 = scmp.eq.s32.totalorder %s19, 0
      %p40 = por %p38, %p39
      %p41 = scmp.ne.s32.totalorder %s27, %s28
      %p42 = scmp.eq.s32.totalorder %s20, 1
      %p43 = por %p41, %p42
      %p45 = scmp.ne.s32.totalorder %s28, %s44
      %p46 = scmp.eq.s32.totalorder %s20, 0
      %p47 = por %p45, %p46
      %s49 = sadd.s32 %s48, 1
      %p52 = scmp.eq.s32.totalorder %s14, 1
      %p53 = scmp.ne.s32.totalorder %s48, %s50
      %p54 = scmp.eq.s32.totalorder %s14, 0
      %p55 = por %p53, %p54
      %p56 = scmp.ne.s32.totalorder %s48, %s50
      %p57 = scmp.eq.s32.totalorder %s19, 1
      %p58 = por %p56, %p57
      %p59 = scmp.ne.s32.totalorder %s50, %s51
      %p60 = scmp.eq.s32.totalorder %s19, 0
      %p61 = por %p59, %p60
      %p62 = scmp.ne.s32.totalorder %s50, %s51
      %p63 = scmp.eq.s32.totalorder %s20, 1
      %p64 = por %p62, %p63
      %p66 = scmp.ne.s32.totalorder %s51, %s65
      %p67 = scmp.eq.s32.totalorder %s20, 0
      %p68 = por %p66, %p67
      %s70 = sadd.s32 %s69, 1
      %p73 = scmp.eq.s32.totalorder %s14, 1
      %p74 = scmp.ne.s32.totalorder %s69, %s71
      %p75 = scmp.eq.s32.totalorder %s14, 0
      %p76 = por %p74, %p75
      %p77 = scmp.ne.s32.totalorder %s69, %s71
      %p78 = scmp.eq.s32.totalorder %s19, 1
      %p79 = por %p77, %p78
      %p80 = scmp.ne.s32.totalorder %s71, %s72
      %p81 = scmp.eq.s32.totalorder %s19, 0
      %p82 = por %p80, %p81
      %p83 = scmp.ne.s32.totalorder %s71, %s72
      %p84 = scmp.eq.s32.totalorder %s20, 1
      %p85 = por %p83, %p84
      %p87 = scmp.ne.s32.totalorder %s72, %s86
      %p88 = scmp.eq.s32.totalorder %s20, 0
      %p89 = por %p87, %p88
      %s91 = sadd.s32 %s90, 1
      %p94 = scmp.eq.s32.totalorder %s14, 1
      %p95 = scmp.ne.s32.totalorder %s90, %s92
      %p96 = scmp.eq.s32.totalorder %s14, 0
      %p97 = por %p95, %p96
      %p98 = scmp.ne.s32.totalorder %s90, %s92
      %p99 = scmp.eq.s32.totalorder %s19, 1
      %p100 = por %p98, %p99
      %p101 = scmp.ne.s32.totalorder %s92, %s93
      %p102 = scmp.eq.s32.totalorder %s19, 0
      %p103 = por %p101, %p102
      %p104 = scmp.ne.s32.totalorder %s92, %s93
      %p105 = scmp.eq.s32.totalorder %s20, 1
      %p106 = por %p104, %p105
      %p108 = scmp.ne.s32.totalorder %s93, %s107
      %p109 = scmp.eq.s32.totalorder %s20, 0
      %p110 = por %p108, %p109
      %s112 = sadd.s32 %s111, 1
      %p115 = scmp.eq.s32.totalorder %s14, 1
      %p116 = scmp.ne.s32.totalorder %s111, %s113
      %p117 = scmp.eq.s32.totalorder %s14, 0
      %p118 = por %p116, %p117
      %p119 = scmp.ne.s32.totalorder %s111, %s113
      %p120 = scmp.eq.s32.totalorder %s19, 1
      %p121 = por %p119, %p120
      %p122 = scmp.ne.s32.totalorder %s113, %s114
      %p123 = scmp.eq.s32.totalorder %s19, 0
      %p124 = por %p122, %p123
      %p125 = scmp.ne.s32.totalorder %s113, %s114
      %p126 = scmp.eq.s32.totalorder %s20, 1
      %p127 = por %p125, %p126
      %p129 = scmp.ne.s32.totalorder %s114, %s128
      %p130 = scmp.eq.s32.totalorder %s20, 0
      %p131 = por %p129, %p130
      %s132 = ssub.s32 %s14, %s21
      %p133 = scmp.eq.s32.totalorder %s132, 0
      %s135 = sadd.s32 %s134, 1
      %s136 = scalar_select %p133, %s134, %s135
      %p139 = pneg %p133
      %p140 = scmp.eq.s32.totalorder %s14, 1
      %p141 = por %p139, %p140
      %p142 = scmp.ne.s32.totalorder %s134, %s137
      %p143 = scmp.eq.s32.totalorder %s14, 0
      %p144 = por %p142, %p143
      %p145 = scmp.ne.s32.totalorder %s134, %s137
      %p146 = scmp.eq.s32.totalorder %s19, 1
      %p147 = por %p145, %p146
      %p148 = scmp.ne.s32.totalorder %s137, %s138
      %p149 = scmp.eq.s32.totalorder %s19, 0
      %p150 = por %p148, %p149
      %p151 = scmp.ne.s32.totalorder %s137, %s138
      %p152 = scmp.eq.s32.totalorder %s20, 1
      %p153 = por %p151, %p152
      %p155 = scmp.ne.s32.totalorder %s138, %s154
      %p156 = scmp.eq.s32.totalorder %s20, 0
      %p157 = por %p155, %p156
      %p158 = scmp.le.s32.totalorder 1, %s14
      %p159 = scmp.lt.s32.totalorder %s14, 3
      %p160 = pnand %p158, %p159
      %p161 = pneg %p160
      // Predicated region
      $region9: #{adapter_forward.1} parent=5 // pred_check
        _
      $region10: #{adapter_forward.1} parent=5 // pred_check_branch
        %163 = sbr.rel (%p160) target = $region12
      $region11: #{adapter_forward.1} parent=5 // pred_region
        %s164 = ssub.s32 %s14, 1
        // Predicated region
        $region13: #{adapter_forward.1} parent=11 // pred_check
          %p165 = pneg %p61
        $region14: #{adapter_forward.1} parent=11 // pred_check_branch
          %167 = sbr.rel (%p165) target = $region16
        $region15: #{adapter_forward.1} parent=11 // pred_region
          _
        $region16: #{adapter_forward.1} parent=11 // pred_fallthru
          _
        // Predicated region
        $region17: #{adapter_forward.1} parent=11 // pred_check
          %p168 = pneg %p82
        $region18: #{adapter_forward.1} parent=11 // pred_check_branch
          %170 = sbr.rel (%p168) target = $region20
        $region19: #{adapter_forward.1} parent=11 // pred_region
          _
        $region20: #{adapter_forward.1} parent=11 // pred_fallthru
          _
        // Predicated region
        $region21: #{adapter_forward.1} parent=11 // pred_check
          %p171 = pneg %p103
        $region22: #{adapter_forward.1} parent=11 // pred_check_branch
          %173 = sbr.rel (%p171) target = $region24
        $region23: #{adapter_forward.1} parent=11 // pred_region
          _
        $region24: #{adapter_forward.1} parent=11 // pred_fallthru
          _
        // Predicated region
        $region25: #{adapter_forward.1} parent=11 // pred_check
          %p174 = pneg %p124
        $region26: #{adapter_forward.1} parent=11 // pred_check_branch
          %176 = sbr.rel (%p174) target = $region28
        $region27: #{adapter_forward.1} parent=11 // pred_region
          _
        $region28: #{adapter_forward.1} parent=11 // pred_fallthru
          _
      $region12: #{adapter_forward.1} parent=5 // pred_fallthru
        _
      %p177 = scmp.lt.s32.totalorder %s14, 2
      // Predicated region
      $region29: #{adapter_forward.1} parent=5 // pred_check
        %p178 = pneg %p177
      $region30: #{adapter_forward.1} parent=5 // pred_check_branch
        %180 = sbr.rel (%p178) target = $region32
      $region31: #{adapter_forward.1} parent=5 // pred_region
        // Predicated region
        $region33: #{adapter_forward.1} parent=31 // pred_check
          %p181 = pneg %p34
        $region34: #{adapter_forward.1} parent=31 // pred_check_branch
          %183 = sbr.rel (%p181) target = $region36
        $region35: #{adapter_forward.1} parent=31 // pred_region
          %p184 = scmp.lt.s32.totalorder %s14, 1
          %s185 = scalar_select %p184, %s14, 1
          %s186 = smul.addr %s185, 8
          %s187 = scalar_lea.vmem %s0, %s186
        $region36: #{adapter_forward.1} parent=31 // pred_fallthru
          _
      $region32: #{adapter_forward.1} parent=5 // pred_fallthru
        _
      %p188 = scmp.le.s32.totalorder 1, %s14
      %p189 = scmp.lt.s32.totalorder %s14, 3
      %p190 = pnand %p188, %p189
      %p191 = pneg %p190
      // Predicated region
      $region37: #{adapter_forward.1} parent=5 // pred_check
        _
      $region38: #{adapter_forward.1} parent=5 // pred_check_branch
        %193 = sbr.rel (%p190) target = $region40
      $region39: #{adapter_forward.1} parent=5 // pred_region
        %s194 = ssub.s32 %s14, 1
        %p195 = scmp.lt.s32.totalorder %s19, 1
        %s196 = scalar_select %p195, %s19, 1
        %s197 = smul.addr %s196, 8
        %s198 = scalar_lea.vmem %s0, %s197
        %p199 = pneg %p40
        %p200 = pneg %p37
        %p201 = pneg %p61
        %p202 = pneg %p58
        %p203 = pneg %p82
        %p204 = pneg %p79
        %p205 = pneg %p103
        %p206 = pneg %p100
        %p207 = pneg %p124
        %p208 = pneg %p121
        %p209 = pneg %p150
        %p210 = pneg %p147
        %s211 = sand.u32 %s137, 1
        %s212 = scalar_lea.sflag [#allocation3], %s211
        %s213 = sand.u32 %s137, 1
        %s214 = smul.addr %s213, 8
        %s215 = scalar_lea.vmem [#allocation2], %s214
        %p216 = scmp.lt.s32.totalorder %s19, 1
        %s217 = scalar_select %p216, %s19, 1
        %s218 = smul.addr %s217, 8
        %s219 = scalar_lea.vmem %s0, %s218
        %v220 = vld [vmem:[%s219] sm:$0xff]
        %v221 = vld [vmem:[%s1] sm:$0xff]
        %v222 = vld [vmem:[%s1 + $0x8] sm:$0xff]
        %v223 = vld [vmem:[%s1 + $0x10] sm:$0xff]
        %v224 = vld [vmem:[%s1 + $0x18] sm:$0xff]
        %v225 = vld [vmem:[%s2] sm:$0x1]
        %v227 = vlaneseq
        %v228 = vshrl.u32 %v227, 7
        %v229 = vsub.s32 0, %v228
        %v230 = vrot.slane %v225, %v229
        %vm232 = vcmask 261120
        %v234 = vsel %vm232, %v220, 0
        %236 = vmatprep.subr.mxu0 0.0
        %237 = vmatpush1.msra.mxu0 %v221
        %238 = vmatprep.subr.mxu0 0.0
        %239 = vmatpush1.msra.mxu0 %v222
        %240 = vmatprep.subr.mxu0 0.0
        %241 = vmatpush1.msra.mxu0 %v223
        %242 = vmatprep.subr.mxu0 0.0
        %243 = vmatpush1.msra.mxu0 %v224
        %244 = vmatprep.subr.mxu0 0.0
        %245 = vmatpush1.msra.mxu0 0.0
        %246 = vmatprep.subr.mxu0 0.0
        %247 = vmatpush1.msra.mxu0 0.0
        %248 = vmatprep.subr.mxu0 0.0
        %249 = vmatpush1.msra.mxu0 0.0
        %250 = vmatprep.subr.mxu0 0.0
        %251 = vmatpush1.msra.mxu0 0.0
        %252 = vmatprep.subr.mxu0 0.0
        %253 = vmatpush1.msra.mxu0 0.0
        %254 = vmatprep.subr.mxu0 0.0
        %255 = vmatpush1.msra.mxu0 0.0
        %256 = vmatprep.subr.mxu0 0.0
        %257 = vmatpush1.msra.mxu0 0.0
        %258 = vmatprep.subr.mxu0 0.0
        %259 = vmatpush1.msra.mxu0 0.0
        %260 = vmatprep.subr.mxu0 0.0
        %261 = vmatpush1.msra.mxu0 0.0
        %262 = vmatprep.subr.mxu0 0.0
        %263 = vmatpush1.msra.mxu0 0.0
        %264 = vmatprep.subr.mxu0 0.0
        %265 = vmatpush1.msra.mxu0 0.0
        %266 = vmatprep.subr.mxu0 0.0
        %267 = vmatpush1.msra.mxu0 0.0
        %268 = vmatprep.subr.mxu0 0.0
        %269 = vmatpush1.msra.mxu0 0.0
        %270 = vmatprep.subr.mxu0 0.0
        %271 = vmatpush1.msra.mxu0 0.0
        %272 = vmatprep.subr.mxu0 0.0
        %273 = vmatpush1.msra.mxu0 0.0
        %274 = vmatprep.subr.mxu0 0.0
        %275 = vmatpush1.msra.mxu0 0.0
        %276 = vmatprep.subr.mxu0 0.0
        %277 = vmatpush1.msra.mxu0 0.0
        %278 = vmatprep.subr.mxu0 0.0
        %279 = vmatpush1.msra.mxu0 0.0
        %280 = vmatprep.subr.mxu0 0.0
        %281 = vmatpush1.msra.mxu0 0.0
        %282 = vmatprep.subr.mxu0 0.0
        %283 = vmatpush1.msra.mxu0 0.0
        %284 = vmatprep.subr.mxu0 0.0
        %285 = vmatpush1.msra.mxu0 0.0
        %286 = vmatprep.subr.mxu0 0.0
        %287 = vmatpush1.msra.mxu0 0.0
        %288 = vmatprep.subr.mxu0 0.0
        %289 = vmatpush1.msra.mxu0 0.0
        %290 = vmatprep.subr.mxu0 0.0
        %291 = vmatpush1.msra.mxu0 0.0
        %292 = vmatprep.subr.mxu0 0.0
        %293 = vmatpush1.msra.mxu0 0.0
        %294 = vmatprep.subr.mxu0 0.0
        %295 = vmatpush1.msra.mxu0 0.0
        %296 = vmatprep.subr.mxu0 0.0
        %297 = vmatpush1.msra.mxu0 0.0
        %298 = vmatprep.subr.mxu0 0.0
        %299 = vmatpush1.msra.mxu0 0.0
        %300 = vmatprep.mubr.f32.mxu0 0.0
        %301 = vmatmul.mubr.f32.gmra.mrb[0].mxu0 %v234
        %v302 = vpop.f32.mrb[0].mxu0
        %v303 = vadd.f32 %v230, %v302
        %v304 = vpop.f32.mrb[0].mxu0
        %305 = vdwg.mxu0
        %v306 = vmax.f32 %v303, 0.0
        %v307 = vld [vmem:[%s3] sm:$0xff]
        %v308 = vld [vmem:[%s4] sm:$0x1]
        %v310 = vlaneseq
        %v311 = vshrl.u32 %v310, 7
        %v312 = vsub.s32 0, %v311
        %v313 = vrot.slane %v308, %v312
        %vm315 = vcmask 64512
        %v317 = vsel %vm315, %v306, 0
        %319 = vmatprep.subr.mxu0 0.0
        %320 = vmatpush1.msra.mxu0 %v307
        %321 = vmatprep.subr.mxu0 0.0
        %322 = vmatpush1.msra.mxu0 0.0
        %323 = vmatprep.subr.mxu0 0.0
        %324 = vmatpush1.msra.mxu0 0.0
        %325 = vmatprep.subr.mxu0 0.0
        %326 = vmatpush1.msra.mxu0 0.0
        %327 = vmatprep.subr.mxu0 0.0
        %328 = vmatpush1.msra.mxu0 0.0
        %329 = vmatprep.subr.mxu0 0.0
        %330 = vmatpush1.msra.mxu0 0.0
        %331 = vmatprep.subr.mxu0 0.0
        %332 = vmatpush1.msra.mxu0 0.0
        %333 = vmatprep.subr.mxu0 0.0
        %334 = vmatpush1.msra.mxu0 0.0
        %335 = vmatprep.subr.mxu0 0.0
        %336 = vmatpush1.msra.mxu0 0.0
        %337 = vmatprep.subr.mxu0 0.0
        %338 = vmatpush1.msra.mxu0 0.0
        %339 = vmatprep.subr.mxu0 0.0
        %340 = vmatpush1.msra.mxu0 0.0
        %341 = vmatprep.subr.mxu0 0.0
        %342 = vmatpush1.msra.mxu0 0.0
        %343 = vmatprep.subr.mxu0 0.0
        %344 = vmatpush1.msra.mxu0 0.0
        %345 = vmatprep.subr.mxu0 0.0
        %346 = vmatpush1.msra.mxu0 0.0
        %347 = vmatprep.subr.mxu0 0.0
        %348 = vmatpush1.msra.mxu0 0.0
        %349 = vmatprep.subr.mxu0 0.0
        %350 = vmatpush1.msra.mxu0 0.0
        %351 = vmatprep.subr.mxu0 0.0
        %352 = vmatpush1.msra.mxu0 0.0
        %353 = vmatprep.subr.mxu0 0.0
        %354 = vmatpush1.msra.mxu0 0.0
        %355 = vmatprep.subr.mxu0 0.0
        %356 = vmatpush1.msra.mxu0 0.0
        %357 = vmatprep.subr.mxu0 0.0
        %358 = vmatpush1.msra.mxu0 0.0
        %359 = vmatprep.subr.mxu0 0.0
        %360 = vmatpush1.msra.mxu0 0.0
        %361 = vmatprep.subr.mxu0 0.0
        %362 = vmatpush1.msra.mxu0 0.0
        %363 = vmatprep.subr.mxu0 0.0
        %364 = vmatpush1.msra.mxu0 0.0
        %365 = vmatprep.subr.mxu0 0.0
        %366 = vmatpush1.msra.mxu0 0.0
        %367 = vmatprep.subr.mxu0 0.0
        %368 = vmatpush1.msra.mxu0 0.0
        %369 = vmatprep.subr.mxu0 0.0
        %370 = vmatpush1.msra.mxu0 0.0
        %371 = vmatprep.subr.mxu0 0.0
        %372 = vmatpush1.msra.mxu0 0.0
        %373 = vmatprep.subr.mxu0 0.0
        %374 = vmatpush1.msra.mxu0 0.0
        %375 = vmatprep.subr.mxu0 0.0
        %376 = vmatpush1.msra.mxu0 0.0
        %377 = vmatprep.subr.mxu0 0.0
        %378 = vmatpush1.msra.mxu0 0.0
        %379 = vmatprep.subr.mxu0 0.0
        %380 = vmatpush1.msra.mxu0 0.0
        %381 = vmatprep.subr.mxu0 0.0
        %382 = vmatpush1.msra.mxu0 0.0
        %383 = vmatprep.mubr.f32.mxu0 0.0
        %384 = vmatmul.mubr.f32.gmra.mrb[0].mxu0 %v317
        %v385 = vpop.f32.mrb[0].mxu0
        %v386 = vadd.f32 %v313, %v385
        %v387 = vpop.f32.mrb[0].mxu0
        %388 = vdwg.mxu0
        %389 = vst.msk [vmem:[%s215] sm:$0xff] %vm232, %v386
        %s390 = sand.u32 %s137, 1
        %s391 = scalar_lea.sflag [#allocation3], %s390
        %s392 = sand.u32 %s137, 1
        %s393 = smul.addr %s392, 8
        %s394 = scalar_lea.vmem [#allocation2], %s393
        // Predicated region
        $region41: #{adapter_forward.1} parent=39 // pred_check
          %p395 = pneg %p147
        $region42: #{adapter_forward.1} parent=39 // pred_check_branch
          %397 = sbr.rel (%p395) target = $region44
        $region43: #{adapter_forward.1} parent=39 // pred_region
          %s399 = ssub.s32 128, 128
          %400 = vsyncadd %s391, %s399
          %s401 = smul.addr %s19, 128
          %s402 = scalar_lea.hbm %s5, %s401
          %s404 = sshll.u32 %s394, 4
          %s405 = int_to_ptr.vmem [resolvable:$true] %s404
          %407 = dma.vmem_to_hbm [thread:$0]  %s405, 128, %s402, %s391
        $region44: #{adapter_forward.1} parent=39 // pred_fallthru
          _
      $region40: #{adapter_forward.1} parent=5 // pred_fallthru
        _
      %p408 = scmp.le.s32.totalorder 2, %s14
      // Predicated region
      $region45: #{adapter_forward.1} parent=5 // pred_check
        %p409 = pneg %p408
      $region46: #{adapter_forward.1} parent=5 // pred_check_branch
        %411 = sbr.rel (%p409) target = $region48
      $region47: #{adapter_forward.1} parent=5 // pred_region
        %s412 = ssub.s32 %s14, 2
        // Predicated region
        $region49: #{adapter_forward.1} parent=47 // pred_check
          %p413 = pneg %p153
        $region50: #{adapter_forward.1} parent=47 // pred_check_branch
          %415 = sbr.rel (%p413) target = $region52
        $region51: #{adapter_forward.1} parent=47 // pred_region
          %s416 = sand.u32 %s138, 1
          %s417 = scalar_lea.sflag [#allocation3], %s416
          %s418 = sand.u32 %s138, 1
          %s419 = smul.addr %s418, 8
          %s420 = scalar_lea.vmem [#allocation2], %s419
          %421 = dma.done %s417, 128
        $region52: #{adapter_forward.1} parent=47 // pred_fallthru
          _
      $region48: #{adapter_forward.1} parent=5 // pred_fallthru
        _
    $region6: #{adapter_forward.1} parent=1 // loop_footer
      %s18 = sadd.s32 1, %s14
    $region7: #{adapter_forward.1} parent=1 // loop_footer_branch
      %13 = sbr.rel target = $region3
    $region8: #{adapter_forward.1} parent=1 // loop_exit
      _
    %422 = vsyncpa [#allocation3], 1
    %s423 = scalar_lea.sflag [#allocation3], 1
    %424 = vsyncpa %s423, 1

</llo_original>
